<compile_context>
chip_gen: v7x
topology: tpu7x:2x2x1
jax: 0.10.0
libtpu: 0.0.40
codegen_flags: <defaults>
</compile_context>

<pallas_src>
import jax
import jax.numpy as jnp
from jax.experimental import pallas as pl
from jax.experimental.pallas import tpu as pltpu


TWO_PI = 2.0 * jnp.pi


def _round_up(x, m):
    return (x + m - 1) // m * m


# ----------------------------------------------------------------------------
# Pallas kernel: pointwise (1x1) group-conv contraction
#   weights: [M = Cout*Gout, K = Cin*Gin]   (bf16, resident in VMEM)
#   x:       [B, K, HW_pad]                 (bf16, tiled along HW)
#   out:     [B, M, HW_pad]                 (f32, written in final layout)
# out[b] = W @ x[b]  with f32 accumulation on the MXU.
# ----------------------------------------------------------------------------
def _pointwise_gconv_kernel(w_ref, x_ref, o_ref):
    # w_ref: (M, K)   x_ref: (1, K, T)   o_ref: (1, M, T)
    o_ref[0] = jnp.dot(w_ref[...], x_ref[0], preferred_element_type=jnp.float32)


def pointwise_gconv_pallas(x_r, weights_cm, *, max_hw_tile=8192,
                           vmem_budget=12 * 1024 * 1024):
    """x_r: [B, K, HW] float, weights_cm: [Cout*Gout, K] float (Cout-major).

    Returns [B, Cout*Gout, HW] f32 where the M axis is Cout-major, so a plain
    reshape gives [B, Cout, Gout, H, W] without any transpose.
    """
    B, K, HW = x_r.shape
    M, K2 = weights_cm.shape
    assert K == K2

    # bf16 I/O (halves HBM read traffic), f32 accumulation inside the kernel.
    x_bf = x_r.astype(jnp.bfloat16)
    w_bf = weights_cm.astype(jnp.bfloat16)

    # Lane-dense HW tile: multiple of 128, bounded by a conservative VMEM budget
    # (double-buffered bf16 x tile + f32 out tile), fits the v5e 16 MiB scoped
    # default with headroom on v6e/v7x.
    per_lane_bytes = 2 * (K * 2 + M * 4)
    budget_tile = max(128, (vmem_budget // per_lane_bytes) // 128 * 128)
    hw_tile = min(_round_up(HW, 128), min(max_hw_tile, budget_tile))
    hw_pad = _round_up(HW, hw_tile)
    if hw_pad != HW:
        x_bf = jnp.pad(x_bf, ((0, 0), (0, 0), (0, hw_pad - HW)))
    n_tiles = hw_pad // hw_tile

    out = pl.pallas_call(
        _pointwise_gconv_kernel,
        out_shape=jax.ShapeDtypeStruct((B, M, hw_pad), jnp.float32),
        grid_spec=pltpu.PrefetchScalarGridSpec(
            num_scalar_prefetch=0,
            grid=(B, n_tiles),
            in_specs=[
                # Tiny weight tensor stays resident across the whole grid.
                pl.BlockSpec((M, K), lambda b, t: (0, 0)),
                pl.BlockSpec((1, K, hw_tile), lambda b, t: (b, 0, t)),
            ],
            out_specs=pl.BlockSpec((1, M, hw_tile), lambda b, t: (b, 0, t)),
        ),
        compiler_params=pltpu.CompilerParams(
            dimension_semantics=("parallel", "parallel")),
    )(w_bf, x_bf)

    if hw_pad != HW:
        out = out[:, :, :HW]
    return out


# ----------------------------------------------------------------------------
# SE2-like group ops (dimension=3, dimension_Rd=2, dimension_stabilizer=1)
# ----------------------------------------------------------------------------
def se2_inv(theta):
    return jnp.mod(-theta, TWO_PI)


def se2_left_action_on_H(h, g):
    # h: [S, Gout], g: [S, Gin] -> [S, Gout, Gin]
    return jnp.mod(h[..., :, None] + g[..., None, :], TWO_PI)


def se2_normalize_g_distance(theta):
    # map [0, 2pi) -> [-1, 1)
    return theta / jnp.pi - 1.0


# ----------------------------------------------------------------------------
# SIREN kernelnet (dim_input_space = dimension_stabilizer = 1)
# Operates on coords [N, 1, L] via pointwise linear layers + sine activations,
# producing [N, Cout*Cin, L] — same convention as ck.SIREN with 1x1 convs.
# ----------------------------------------------------------------------------
def init_siren_params(key, dim_in, hidden, out_ch, no_layers, omega0):
    params = []
    keys = jax.random.split(key, no_layers + 1)
    w = jax.random.uniform(keys[0], (hidden, dim_in), jnp.float32,
                           minval=-1.0 / dim_in, maxval=1.0 / dim_in)
    params.append((w, jnp.zeros((hidden,), jnp.float32)))
    lim = (6.0 / hidden) ** 0.5 / omega0
    for i in range(1, no_layers):
        w = jax.random.uniform(keys[i], (hidden, hidden), jnp.float32,
                               minval=-lim, maxval=lim)
        params.append((w, jnp.zeros((hidden,), jnp.float32)))
    w = jax.random.uniform(keys[-1], (out_ch, hidden), jnp.float32,
                           minval=-lim, maxval=lim)
    params.append((w, jnp.zeros((out_ch,), jnp.float32)))
    return params


def siren_apply(params, coords, omega0):
    # coords: [N, dim_in, L] -> [N, out_ch, L]
    h = coords
    for (w, b) in params[:-1]:
        h = jnp.sin(omega0 * (jnp.einsum('oc,ncl->nol', w, h) + b[None, :, None]))
    w, b = params[-1]
    return jnp.einsum('oc,ncl->nol', w, h) + b[None, :, None]


# ----------------------------------------------------------------------------
# PointwiseGroupConv forward
# ----------------------------------------------------------------------------
def make_pointwise_weights(input_g_elems, output_g_elems, siren_params,
                           in_channels, out_channels, omega0):
    """Returns weights in [Cout*Gout, Cin*Gin] (Cout-major) layout."""
    acted = se2_left_action_on_H(se2_inv(output_g_elems), input_g_elems)  # [S,Gout,Gin]
    acted = se2_normalize_g_distance(acted).astype(jnp.float32)
    acted = acted[..., None]                         # SE2: unsqueeze(-1) -> [S,Gout,Gin,1]

    S, Gout, Gin = acted.shape[0], acted.shape[1], acted.shape[2]
    # transpose(-1,-2).view(S*Gout, dim_stabilizer=1, Gin)
    coords = jnp.swapaxes(acted, -1, -2).reshape(S * Gout, 1, Gin)

    kvals = siren_apply(siren_params, coords, omega0)            # [S*Gout, Cout*Cin, Gin]
    conv_kernel = kvals.reshape(S * Gout, out_channels, in_channels, Gin)

    if S != 1:
        # TODO(synk): grouped conv2d path for no_samples > 1 not implemented here.
        raise NotImplementedError("no_samples > 1 path not implemented")

    # [Gout, Cout, Cin*Gin] -> [Cout, Gout, K] -> [Cout*Gout, K]
    weights = conv_kernel.reshape(Gout, out_channels, in_channels * Gin)
    weights_cm = jnp.swapaxes(weights, 0, 1).reshape(out_channels * Gout,
                                                     in_channels * Gin)
    return weights_cm, Gout, Gin


def pointwise_group_conv_forward(x, input_g_elems, output_g_elems,
                                 siren_params, in_channels, out_channels,
                                 omega0):
    weights_cm, Gout, Gin = make_pointwise_weights(
        input_g_elems, output_g_elems, siren_params,
        in_channels, out_channels, omega0)

    B, Cin, Gin_x, H, W = x.shape
    assert Cin == in_channels and Gin_x == Gin

    x_r = x.reshape(B, Cin * Gin, H * W)
    out = pointwise_gconv_pallas(x_r, weights_cm)     # [B, Cout*Gout, HW] f32
    out = out.reshape(B, out_channels, Gout, H, W)    # already channel-major: no transpose
    return out, output_g_elems


if __name__ == "__main__":
    # Small deterministic shapes
    B, Cin, Cout = 2, 8, 16
    Gin, Gout = 4, 4
    H = W = 16
    hidden, no_layers, omega0 = 32, 3, 10.0

    key = jax.random.PRNGKey(0)
    k_x, k_gin, k_gout, k_net = jax.random.split(key, 4)

    x = jax.random.normal(k_x, (B, Cin, Gin, H, W), jnp.float32)
    input_g_elems = jax.random.uniform(k_gin, (1, Gin), jnp.float32,
                                       minval=0.0, maxval=TWO_PI)
    output_g_elems = jax.random.uniform(k_gout, (1, Gout), jnp.float32,
                                        minval=0.0, maxval=TWO_PI)

    siren_params = init_siren_params(k_net, dim_in=1, hidden=hidden,
                                     out_ch=Cout * Cin, no_layers=no_layers,
                                     omega0=omega0)

    out, out_g = pointwise_group_conv_forward(
        x, input_g_elems, output_g_elems, siren_params, Cin, Cout, omega0)
    out = jax.block_until_ready(out)
    assert out.shape == (B, Cout, Gout, H, W)

    # Reference check (plain JAX einsum) of the Pallas contraction path,
    # using the same bf16-rounded inputs the kernel consumes.
    weights_cm, _, _ = make_pointwise_weights(
        input_g_elems, output_g_elems, siren_params, Cin, Cout, omega0)
    x_r = x.reshape(B, Cin * Gin, H * W)
    w_b = weights_cm.astype(jnp.bfloat16).astype(jnp.float32)
    x_b = x_r.astype(jnp.bfloat16).astype(jnp.float32)
    ref = jnp.einsum('mk,bkp->bmp', w_b, x_b,
                     precision=jax.lax.Precision.HIGHEST)
    ref = ref.reshape(B, Cout, Gout, H, W)

    assert jnp.allclose(out, ref, atol=1e-2, rtol=1e-2)
    print("KERNEL_OK")
</pallas_src>

<mosaic_0001>
module attributes {stable_mosaic.version = 11 : i64} {
  func.func @_pointwise_gconv_kernel(%arg0: i32, %arg1: i32, %arg2: memref<64x32xbf16, #tpu.memory_space<vmem>>, %arg3: memref<1x32x256xbf16, #tpu.memory_space<vmem>>, %arg4: memref<1x64x256xf32, #tpu.memory_space<vmem>>) attributes {dimension_semantics = [#tpu.dimension_semantics<parallel>, #tpu.dimension_semantics<parallel>], iteration_bounds = array<i64: 2, 1>, scalar_prefetch = 0 : i64, scratch_operands = 0 : i64, tpu.core_type = #tpu.core_type<tc>, window_params = [{pipeline_mode = #tpu.pipeline_mode<synchronous>, transform_indices = @transform_0, window_bounds = array<i64: 64, 32>}, {transform_indices = @transform_1, window_bounds = array<i64: 1, 32, 256>}, {transform_indices = @transform_2, window_bounds = array<i64: 1, 64, 256>}]} {
    %c0 = arith.constant 0 : index
    %c0_0 = arith.constant 0 : index
    %0 = vector.load %arg2[%c0, %c0_0] : memref<64x32xbf16, #tpu.memory_space<vmem>>, vector<64x32xbf16>
    %c0_1 = arith.constant 0 : index
    %c0_2 = arith.constant 0 : index
    %c0_3 = arith.constant 0 : index
    %1 = vector.load %arg3[%c0_1, %c0_2, %c0_3] : memref<1x32x256xbf16, #tpu.memory_space<vmem>>, vector<1x32x256xbf16>
    %2 = vector.shape_cast %1 : vector<1x32x256xbf16> to vector<32x256xbf16>
    %cst = arith.constant dense<0.000000e+00> : vector<64x256xf32>
    %3 = tpu.matmul %0, %2, %cst {dimension_numbers = #tpu.dot_dimension_numbers<[1], [0], [0], [1], [0, 0, 1, 1], [], []>} : vector<64x32xbf16>, vector<32x256xbf16>, vector<64x256xf32> -> vector<64x256xf32>
    %c0_4 = arith.constant 0 : index
    %c0_5 = arith.constant 0 : index
    %c0_6 = arith.constant 0 : index
    %4 = vector.load %arg4[%c0_4, %c0_5, %c0_6] : memref<1x64x256xf32, #tpu.memory_space<vmem>>, vector<1x64x256xf32>
    %5 = vector.shape_cast %4 : vector<1x64x256xf32> to vector<64x256xf32>
    %6 = vector.shape_cast %3 : vector<64x256xf32> to vector<1x64x256xf32>
    tpu.vector_store %arg4[%c0_4, %c0_5, %c0_6], %6 {strides = array<i32>} : memref<1x64x256xf32, #tpu.memory_space<vmem>>, vector<1x64x256xf32>,
    return
  }
  func.func @transform_0(%arg0: i32, %arg1: i32) -> (i32, i32) {
    %c0_i32 = arith.constant 0 : i32
    %c0_i32_0 = arith.constant 0 : i32
    %c0_i32_1 = arith.constant 0 : i32
    return %c0_i32, %c0_i32_0 : i32, i32
  }
  func.func @transform_1(%arg0: i32, %arg1: i32) -> (i32, i32, i32) {
    %c0_i32 = arith.constant 0 : i32
    %c0_i32_0 = arith.constant 0 : i32
    return %arg0, %c0_i32, %arg1 : i32, i32, i32
  }
  func.func @transform_2(%arg0: i32, %arg1: i32) -> (i32, i32, i32) {
    %c0_i32 = arith.constant 0 : i32
    %c0_i32_0 = arith.constant 0 : i32
    return %arg0, %c0_i32, %arg1 : i32, i32, i32
  }
}

</mosaic_0001>

<llo_original>
// kernel: tpu_custom_call.1
$region0: #{tpu_custom_call.1}
  #allocation0 [shape = 'u32[]', space=smem, size = 0x4, offset = 0x4, fixed_abs, tag = 'smem constant byte address 0x4 - core index']
  #allocation1 [shape = 'u32[144,128]{1,0:T(1,128)}', space=vmem, size = 0x12000, scoped, tag = 'internal scratch']
  %s0 = inlined_call_operand.vmem [shape: bf16[64,32], index: 0, kind: input, shape index: {}]
  %s1 = inlined_call_operand.hbm [shape: bf16[2,32,256], index: 1, kind: input, shape index: {}]
  %s2 = inlined_call_operand.hbm [shape: f32[2,64,256], index: 2, kind: output, shape index: {}]
  %s3 = sld [smem:[#allocation0]]
  $region45: #{tpu_custom_call.1} parent=0
    _
  %s5 = ssub.s32 1, %s3
  %s6 = scalar_select 0, %s5, %s3
  $region1: #{tpu_custom_call.1} parent=0
    #allocation2 [shape = 'u8[32768]{0}', space=vmem, size = 0x8000, scoped, tag = 'input window, operand 1']
    #allocation3 [shape = 's32[2]{0}', space=sflag, size = 0x8, scoped, tag = 'scoped memory for tpu_custom_call.1']
    #allocation4 [shape = 's32[2]{0}', space=sflag, size = 0x8, scoped, tag = 'scoped memory for tpu_custom_call.1']
    #allocation5 [shape = 'u8[131072]{0}', space=vmem, size = 0x20000, scoped, tag = 'output window, operand 0']
    %7 = vsyncpa [#allocation3], 0
    %s8 = scalar_lea.sflag [#allocation3], 1
    %9 = vsyncpa %s8, 0
    %10 = vsyncpa [#allocation4], 0
    %s11 = scalar_lea.sflag [#allocation4], 1
    %12 = vsyncpa %s11, 0
    loop: start=0, step=1, limit=4
    $region2: #{tpu_custom_call.1} parent=1 // loop_pre_header
      _
    $region3: #{tpu_custom_call.1} parent=1 // loop_header
      %s14 = sphi 0, %s18
      %p15 = scmp.ge.s32.totalorder %s14, 4
      %s21 = sphi 0, %s33
      %s22 = sphi 0, %s29
      %s23 = sphi 0, %s21
      %s24 = sphi 0, %s22
      %s25 = sphi 0, %s23
      %s26 = sphi 0, %s24
      %s34 = sphi 0, %s34
      %s36 = sphi 0, %s34
      %s37 = sphi 0, %s36
      %s51 = sphi 0, %s37
      %s59 = sphi 0, %s61
      %s62 = sphi 0, %s59
      %s63 = sphi 0, %s62
      %s79 = sphi 0, %s63
      %s87 = sphi 0, %s89
      %s90 = sphi 0, %s87
      %s91 = sphi 0, %s90
      %s107 = sphi 0, %s91
    $region4: #{tpu_custom_call.1} parent=1 // loop_header_branch
      %17 = sbr.rel (%p15) target = $region8
    $region5: #{tpu_custom_call.1} parent=1 // loop_body
      %s19 = ssub.s32 %s14, 1
      %s20 = ssub.s32 %s14, 2
      %s27 = sadd.s32 1, %s22
      %p28 = scmp.ge.s32.totalorder %s27, 1
      %s29 = scalar_select %p28, 0, %s27
      %s30 = sadd.s32 1, %s21
      %s31 = scalar_select %p28, %s30, %s21
      %p32 = scmp.ge.s32.totalorder %s31, 2
      %s33 = scalar_select %p32, 0, %s31
      %s35 = sadd.s32 %s34, 1
      %p38 = scmp.eq.s32.totalorder %s14, 1
      %p39 = scmp.ne.s32.totalorder %s34, %s36
      %p40 = scmp.eq.s32.totalorder %s14, 0
      %p41 = por %p39, %p40
      %p42 = scmp.ne.s32.totalorder %s34, %s36
      %p43 = scmp.eq.s32.totalorder %s19, 1
      %p44 = por %p42, %p43
      %p45 = scmp.ne.s32.totalorder %s36, %s37
      %p46 = scmp.eq.s32.totalorder %s19, 0
      %p47 = por %p45, %p46
      %p48 = scmp.ne.s32.totalorder %s36, %s37
      %p49 = scmp.eq.s32.totalorder %s20, 1
      %p50 = por %p48, %p49
      %p52 = scmp.ne.s32.totalorder %s37, %s51
      %p53 = scmp.eq.s32.totalorder %s20, 0
      %p54 = por %p52, %p53
      %s55 = ssub.s32 %s21, %s33
      %s56 = ssub.s32 %s22, %s29
      %s57 = sor.u32 %s55, %s56
      %p58 = scmp.eq.s32.totalorder %s57, 0
      %s60 = sadd.s32 %s59, 1
      %s61 = scalar_select %p58, %s59, %s60
      %p64 = pneg %p58
      %p65 = scmp.eq.s32.totalorder %s14, 1
      %p66 = por %p64, %p65
      %p67 = scmp.ne.s32.totalorder %s59, %s62
      %p68 = scmp.eq.s32.totalorder %s14, 0
      %p69 = por %p67, %p68
      %p70 = scmp.ne.s32.totalorder %s59, %s62
      %p71 = scmp.eq.s32.totalorder %s19, 1
      %p72 = por %p70, %p71
      %p73 = scmp.ne.s32.totalorder %s62, %s63
      %p74 = scmp.eq.s32.totalorder %s19, 0
      %p75 = por %p73, %p74
      %p76 = scmp.ne.s32.totalorder %s62, %s63
      %p77 = scmp.eq.s32.totalorder %s20, 1
      %p78 = por %p76, %p77
      %p80 = scmp.ne.s32.totalorder %s63, %s79
      %p81 = scmp.eq.s32.totalorder %s20, 0
      %p82 = por %p80, %p81
      %s83 = ssub.s32 %s21, %s33
      %s84 = ssub.s32 %s22, %s29
      %s85 = sor.u32 %s83, %s84
      %p86 = scmp.eq.s32.totalorder %s85, 0
      %s88 = sadd.s32 %s87, 1
      %s89 = scalar_select %p86, %s87, %s88
      %p92 = pneg %p86
      %p93 = scmp.eq.s32.totalorder %s14, 1
      %p94 = por %p92, %p93
      %p95 = scmp.ne.s32.totalorder %s87, %s90
      %p96 = scmp.eq.s32.totalorder %s14, 0
      %p97 = por %p95, %p96
      %p98 = scmp.ne.s32.totalorder %s87, %s90
      %p99 = scmp.eq.s32.totalorder %s19, 1
      %p100 = por %p98, %p99
      %p101 = scmp.ne.s32.totalorder %s90, %s91
      %p102 = scmp.eq.s32.totalorder %s19, 0
      %p103 = por %p101, %p102
      %p104 = scmp.ne.s32.totalorder %s90, %s91
      %p105 = scmp.eq.s32.totalorder %s20, 1
      %p106 = por %p104, %p105
      %p108 = scmp.ne.s32.totalorder %s91, %s107
      %p109 = scmp.eq.s32.totalorder %s20, 0
      %p110 = por %p108, %p109
      %p111 = scmp.le.s32.totalorder 1, %s14
      %p112 = scmp.lt.s32.totalorder %s14, 3
      %p113 = pnand %p111, %p112
      %p114 = pneg %p113
      // Predicated region
      $region9: #{tpu_custom_call.1} parent=5 // pred_check
        _
      $region10: #{tpu_custom_call.1} parent=5 // pred_check_branch
        %116 = sbr.rel (%p113) target = $region12
      $region11: #{tpu_custom_call.1} parent=5 // pred_region
        %s117 = ssub.s32 %s14, 1
        // Predicated region
        $region13: #{tpu_custom_call.1} parent=11 // pred_check
          %p118 = pneg %p47
        $region14: #{tpu_custom_call.1} parent=11 // pred_check_branch
          %120 = sbr.rel (%p118) target = $region16
        $region15: #{tpu_custom_call.1} parent=11 // pred_region
          _
        $region16: #{tpu_custom_call.1} parent=11 // pred_fallthru
          _
      $region12: #{tpu_custom_call.1} parent=5 // pred_fallthru
        _
      %p121 = scmp.lt.s32.totalorder %s14, 2
      // Predicated region
      $region17: #{tpu_custom_call.1} parent=5 // pred_check
        %p122 = pneg %p121
      $region18: #{tpu_custom_call.1} parent=5 // pred_check_branch
        %124 = sbr.rel (%p122) target = $region20
      $region19: #{tpu_custom_call.1} parent=5 // pred_region
        // Predicated region
        $region21: #{tpu_custom_call.1} parent=19 // pred_check
          %p125 = pneg %p69
        $region22: #{tpu_custom_call.1} parent=19 // pred_check_branch
          %127 = sbr.rel (%p125) target = $region24
        $region23: #{tpu_custom_call.1} parent=19 // pred_region
          %s128 = sand.u32 %s59, 1
          %s129 = scalar_lea.sflag [#allocation3], %s128
          %s130 = sand.u32 %s59, 1
          %s131 = smul.addr %s130, 32
          %s132 = scalar_lea.vmem [#allocation2], %s131
          %s133 = smul.u32 2, %s22
          %s135 = ssub.s32 512, 512
          %136 = vsyncadd %s129, %s135
          %s137 = smul.addr %s21, 8
          %s138 = sadd.s32 %s133, %s137
          %s139 = smul.addr %s138, 64
          %s140 = scalar_lea.hbm %s1, %s139
          %s141 = sshll.u32 %s132, 4
          %s142 = int_to_ptr.vmem [resolvable:$true] %s141
          %147 = dma.hbm_to_vmem [thread:$0]  %s140, 512, %s142, %s129, 128, 128, 8
        $region24: #{tpu_custom_call.1} parent=19 // pred_fallthru
          _
      $region20: #{tpu_custom_call.1} parent=5 // pred_fallthru
        _
      %p148 = scmp.le.s32.totalorder 1, %s14
      %p149 = scmp.lt.s32.totalorder %s14, 3
      %p150 = pnand %p148, %p149
      %p151 = pneg %p150
      // Predicated region
      $region25: #{tpu_custom_call.1} parent=5 // pred_check
        _
      $region26: #{tpu_custom_call.1} parent=5 // pred_check_branch
        %153 = sbr.rel (%p150) target = $region28
      $region27: #{tpu_custom_call.1} parent=5 // pred_region
        %s154 = ssub.s32 %s14, 1
        %s155 = sand.u32 %s62, 1
        %s156 = scalar_lea.sflag [#allocation3], %s155
        %s157 = sand.u32 %s62, 1
        %s158 = smul.addr %s157, 32
        %s159 = scalar_lea.vmem [#allocation2], %s158
        // Predicated region
        $region29: #{tpu_custom_call.1} parent=27 // pred_check
          %p160 = pneg %p75
        $region30: #{tpu_custom_call.1} parent=27 // pred_check_branch
          %162 = sbr.rel (%p160) target = $region32
        $region31: #{tpu_custom_call.1} parent=27 // pred_region
          %163 = dma.done %s156, 512
        $region32: #{tpu_custom_call.1} parent=27 // pred_fallthru
          _
        %p164 = pneg %p47
        %p165 = pneg %p44
        %s166 = sand.u32 %s62, 1
        %s167 = scalar_lea.sflag [#allocation3], %s166
        %s168 = sand.u32 %s62, 1
        %s169 = smul.addr %s168, 32
        %s170 = scalar_lea.vmem [#allocation2], %s169
        %p171 = pneg %p75
        %p172 = pneg %p72
        %p173 = pneg %p103
        %p174 = pneg %p100
        %s175 = sand.u32 %s90, 1
        %s176 = scalar_lea.sflag [#allocation4], %s175
        %s177 = sand.u32 %s90, 1
        %s178 = smul.addr %s177, 128
        %s179 = scalar_lea.vmem [#allocation5], %s178
        %s180 = smul.u32 2, %s24
        %s181 = smul.u32 2, %s24
        %v183 = vld [vmem:[%s0] sm:$0xf]
        %v184 = vld [vmem:[%s0 + $0x4] sm:$0xf]
        %v185 = vld [vmem:[%s0 + $0x8] sm:$0xf]
        %v186 = vld [vmem:[%s0 + $0xc] sm:$0xf]
        %v187 = vld [vmem:[%s0 + $0x10] sm:$0xf]
        %v188 = vld [vmem:[%s0 + $0x14] sm:$0xf]
        %v189 = vld [vmem:[%s0 + $0x18] sm:$0xf]
        %v190 = vld [vmem:[%s0 + $0x1c] sm:$0xf]
        %v191 = vld [vmem:[%s159] sm:$0xff]
        %v192 = vld [vmem:[%s159 + $0x8] sm:$0xff]
        %v193 = vld [vmem:[%s159 + $0x10] sm:$0xff]
        %v194 = vld [vmem:[%s159 + $0x18] sm:$0xff]
        %v203 = vunpack.c.l.b16 %v183
        %v204 = vunpack.c.l.b16 %v184
        %v205 = vunpack.c.l.b16 %v185
        %v206 = vunpack.c.l.b16 %v186
        %v207 = vunpack.c.l.b16 %v187
        %v208 = vunpack.c.l.b16 %v188
        %v209 = vunpack.c.l.b16 %v189
        %v210 = vunpack.c.l.b16 %v190
        %v211 = vpack.c.b16 %v204, %v203
        %v212 = vpack.c.b16 %v206, %v205
        %v213 = vpack.c.b16 %v208, %v207
        %v214 = vpack.c.b16 %v210, %v209
        %v219 = vunpack.c.l.b16 %v191
        %v220 = vunpack.c.h.b16 %v191
        %v221 = vunpack.c.l.b16 %v192
        %v222 = vunpack.c.h.b16 %v192
        %v223 = vunpack.c.l.b16 %v193
        %v224 = vunpack.c.h.b16 %v193
        %v225 = vunpack.c.l.b16 %v194
        %v226 = vunpack.c.h.b16 %v194
        %v227 = vpack.c.b16 %v221, %v219
        %v228 = vpack.c.b16 %v222, %v220
        %v229 = vpack.c.b16 %v225, %v223
        %v230 = vpack.c.b16 %v226, %v224
        %vm235 = vcmask 261120
        %v237 = vsel %vm235, %v211, 0
        %v240 = vsel %vm235, %v212, 0
        %v243 = vsel %vm235, %v213, 0
        %v246 = vsel %vm235, %v214, 0
        %248 = vmatprep.subr.bf16.mxu0 %v228
        %249 = vmatpush1.bf16.msra.mxu0 %v227
        %250 = vmatprep.subr.bf16.mxu0 %v230
        %251 = vmatpush1.bf16.msra.mxu0 %v229
        %252 = vmatprep.subr.bf16.mxu0 0
        %253 = vmatpush1.bf16.msra.mxu0 0
        %254 = vmatprep.subr.bf16.mxu0 0
        %255 = vmatpush1.bf16.msra.mxu0 0
        %256 = vmatprep.subr.bf16.mxu0 0
        %257 = vmatpush1.bf16.msra.mxu0 0
        %258 = vmatprep.subr.bf16.mxu0 0
        %259 = vmatpush1.bf16.msra.mxu0 0
        %260 = vmatprep.subr.bf16.mxu0 0
        %261 = vmatpush1.bf16.msra.mxu0 0
        %262 = vmatprep.subr.bf16.mxu0 0
        %263 = vmatpush1.bf16.msra.mxu0 0
        %264 = vmatprep.subr.bf16.mxu0 0
        %265 = vmatpush1.bf16.msra.mxu0 0
        %266 = vmatprep.subr.bf16.mxu0 0
        %267 = vmatpush1.bf16.msra.mxu0 0
        %268 = vmatprep.subr.bf16.mxu0 0
        %269 = vmatpush1.bf16.msra.mxu0 0
        %270 = vmatprep.subr.bf16.mxu0 0
        %271 = vmatpush1.bf16.msra.mxu0 0
        %272 = vmatprep.subr.bf16.mxu0 0
        %273 = vmatpush1.bf16.msra.mxu0 0
        %274 = vmatprep.subr.bf16.mxu0 0
        %275 = vmatpush1.bf16.msra.mxu0 0
        %276 = vmatprep.subr.bf16.mxu0 0
        %277 = vmatpush1.bf16.msra.mxu0 0
        %278 = vmatprep.subr.bf16.mxu0 0
        %279 = vmatpush1.bf16.msra.mxu0 0
        %280 = vmatprep.mubr.bf16.mxu0 0
        %281 = vmatmul.mubr.bf16.gmra.mrb[0].mxu0 %v237
        %v282 = vpop.f32.mrb[0].mxu0
        %v283 = vadd.f32 0.0, %v282
        %v284 = vpop.f32.mrb[0].mxu0
        %v285 = vadd.f32 0.0, %v284
        %v286 = vpop.f32.mrb[0].mxu0
        %v287 = vadd.f32 0.0, %v286
        %v288 = vpop.f32.mrb[0].mxu0
        %v289 = vadd.f32 0.0, %v288
        %290 = vmatprep.mubr.bf16.mxu0 0
        %291 = vmatmul.mubr.bf16.gmra.mrb[0].mxu0 %v240
        %v292 = vpop.f32.mrb[0].mxu0
        %v293 = vadd.f32 0.0, %v292
        %v294 = vpop.f32.mrb[0].mxu0
        %v295 = vadd.f32 0.0, %v294
        %v296 = vpop.f32.mrb[0].mxu0
        %v297 = vadd.f32 0.0, %v296
        %v298 = vpop.f32.mrb[0].mxu0
        %v299 = vadd.f32 0.0, %v298
        %300 = vmatprep.mubr.bf16.mxu0 0
        %301 = vmatmul.mubr.bf16.gmra.mrb[0].mxu0 %v243
        %v302 = vpop.f32.mrb[0].mxu0
        %v303 = vadd.f32 0.0, %v302
        %v304 = vpop.f32.mrb[0].mxu0
        %v305 = vadd.f32 0.0, %v304
        %v306 = vpop.f32.mrb[0].mxu0
        %v307 = vadd.f32 0.0, %v306
        %v308 = vpop.f32.mrb[0].mxu0
        %v309 = vadd.f32 0.0, %v308
        %310 = vmatprep.mubr.bf16.mxu0 0
        %311 = vmatmul.mubr.bf16.gmra.mrb[0].mxu0 %v246
        %v312 = vpop.f32.mrb[0].mxu0
        %v313 = vadd.f32 0.0, %v312
        %v314 = vpop.f32.mrb[0].mxu0
        %v315 = vadd.f32 0.0, %v314
        %v316 = vpop.f32.mrb[0].mxu0
        %v317 = vadd.f32 0.0, %v316
        %v318 = vpop.f32.mrb[0].mxu0
        %v319 = vadd.f32 0.0, %v318
        %320 = vdwg.mxu0
        %321 = vst [vmem:[%s179] sm:$0xff] %v283
        %322 = vst [vmem:[%s179 + $0x8] sm:$0xff] %v285
        %323 = vst [vmem:[%s179 + $0x10] sm:$0xff] %v287
        %324 = vst [vmem:[%s179 + $0x18] sm:$0xff] %v289
        %325 = vst [vmem:[%s179 + $0x20] sm:$0xff] %v293
        %326 = vst [vmem:[%s179 + $0x28] sm:$0xff] %v295
        %327 = vst [vmem:[%s179 + $0x30] sm:$0xff] %v297
        %328 = vst [vmem:[%s179 + $0x38] sm:$0xff] %v299
        %329 = vst [vmem:[%s179 + $0x40] sm:$0xff] %v303
        %330 = vst [vmem:[%s179 + $0x48] sm:$0xff] %v305
        %331 = vst [vmem:[%s179 + $0x50] sm:$0xff] %v307
        %332 = vst [vmem:[%s179 + $0x58] sm:$0xff] %v309
        %333 = vst [vmem:[%s179 + $0x60] sm:$0xff] %v313
        %334 = vst [vmem:[%s179 + $0x68] sm:$0xff] %v315
        %335 = vst [vmem:[%s179 + $0x70] sm:$0xff] %v317
        %336 = vst [vmem:[%s179 + $0x78] sm:$0xff] %v319
        %s337 = sand.u32 %s90, 1
        %s338 = scalar_lea.sflag [#allocation4], %s337
        %s339 = sand.u32 %s90, 1
        %s340 = smul.addr %s339, 128
        %s341 = scalar_lea.vmem [#allocation5], %s340
        // Predicated region
        $region33: #{tpu_custom_call.1} parent=27 // pred_check
          %p342 = pneg %p100
        $region34: #{tpu_custom_call.1} parent=27 // pred_check_branch
          %344 = sbr.rel (%p342) target = $region36
        $region35: #{tpu_custom_call.1} parent=27 // pred_region
          %s345 = smul.u32 2, %s24
          %s347 = ssub.s32 2048, 2048
          %348 = vsyncadd %s338, %s347
          %s349 = smul.addr %s23, 16
          %s350 = sadd.s32 %s345, %s349
          %s351 = smul.addr %s350, 128
          %s352 = scalar_lea.hbm %s2, %s351
          %s353 = sshll.u32 %s341, 4
          %s354 = int_to_ptr.vmem [resolvable:$true] %s353
          %359 = dma.vmem_to_hbm [thread:$0]  %s354, 2048, %s352, %s338, 256, 256, 16
        $region36: #{tpu_custom_call.1} parent=27 // pred_fallthru
          _
      $region28: #{tpu_custom_call.1} parent=5 // pred_fallthru
        _
      %p360 = scmp.le.s32.totalorder 2, %s14
      // Predicated region
      $region37: #{tpu_custom_call.1} parent=5 // pred_check
        %p361 = pneg %p360
      $region38: #{tpu_custom_call.1} parent=5 // pred_check_branch
        %363 = sbr.rel (%p361) target = $region40
      $region39: #{tpu_custom_call.1} parent=5 // pred_region
        %s364 = ssub.s32 %s14, 2
        // Predicated region
        $region41: #{tpu_custom_call.1} parent=39 // pred_check
          %p365 = pneg %p106
        $region42: #{tpu_custom_call.1} parent=39 // pred_check_branch
          %367 = sbr.rel (%p365) target = $region44
        $region43: #{tpu_custom_call.1} parent=39 // pred_region
          %s368 = sand.u32 %s91, 1
          %s369 = scalar_lea.sflag [#allocation4], %s368
          %s370 = sand.u32 %s91, 1
          %s371 = smul.addr %s370, 128
          %s372 = scalar_lea.vmem [#allocation5], %s371
          %373 = dma.done %s369, 2048
        $region44: #{tpu_custom_call.1} parent=39 // pred_fallthru
          _
      $region40: #{tpu_custom_call.1} parent=5 // pred_fallthru
        _
    $region6: #{tpu_custom_call.1} parent=1 // loop_footer
      %s18 = sadd.s32 1, %s14
    $region7: #{tpu_custom_call.1} parent=1 // loop_footer_branch
      %13 = sbr.rel target = $region3
    $region8: #{tpu_custom_call.1} parent=1 // loop_exit
      _
    %374 = vsyncpa [#allocation3], 1
    %s375 = scalar_lea.sflag [#allocation3], 1
    %376 = vsyncpa %s375, 1
    %377 = vsyncpa [#allocation4], 1
    %s378 = scalar_lea.sflag [#allocation4], 1
    %379 = vsyncpa %s378, 1

</llo_original>
